<compile_context>
chip_gen: v7x
topology: tpu7x:2x2x1
jax: 0.10.0
libtpu: 0.0.40
codegen_flags: <defaults>
</compile_context>

<pallas_src>
import functools

import jax
import jax.numpy as jnp
from jax import lax
from jax.experimental import pallas as pl
from jax.experimental.pallas import tpu as pltpu


def _body_kernel(x_ref, u_ref, out_ref, *, T, A, matmul_cdf):
    # x_ref: (A, TB) logits with the batch on lanes; u_ref/out_ref: (1, TB).
    logits = x_ref[...].astype(jnp.float32) * jnp.float32(T)
    m = jnp.max(logits, axis=0, keepdims=True)              # (1, TB)
    e = jnp.exp(logits - m)                                 # (A, TB) unnormalised probs
    denom = jnp.sum(e, axis=0, keepdims=True)               # (1, TB)

    if matmul_cdf:
        # Small A: inclusive prefix sum over the action (sublane) axis via a tiny
        # in-kernel lower-triangular matmul (built from iotas; no extra input/DMA).
        r = lax.broadcasted_iota(jnp.int32, (A, A), 0)
        c = lax.broadcasted_iota(jnp.int32, (A, A), 1)
        tri = (c <= r).astype(jnp.float32)                  # tri[i, j] = 1 iff j <= i
        cdf = jnp.dot(tri, e, preferred_element_type=jnp.float32)   # (A, TB)
    else:
        # Large A: Hillis-Steele scan — log2(A) XLU rolls + masked adds, O(A log A),
        # no O(A^2) matrix in VMEM.
        idx = lax.broadcasted_iota(jnp.int32, e.shape, 0)
        cdf = e
        shift = 1
        while shift < A:
            rolled = pltpu.roll(cdf, shift=shift, axis=0)   # rolled[i] = cdf[i - shift]
            cdf = cdf + jnp.where(idx >= shift, rolled, 0.0)
            shift *= 2

    # Inverse-CDF draw without normalising: cdf/denom < u  <=>  cdf < u * denom.
    threshold = u_ref[...] * denom                          # (1, TB)
    action = jnp.sum((cdf < threshold).astype(jnp.int32), axis=0, keepdims=True)
    out_ref[...] = jnp.minimum(action, A - 1)               # guard fp round-off


def _pick_tb(B, A, *, target_tile_bytes=2 << 20, min_grid=8):
    """Lane-tile width: ~target_tile_bytes logits tile, multiple of 128 lanes,
    capped so the batch axis keeps >= min_grid grid steps when B is large."""
    if B <= 128:
        return B                                            # single block == full extent
    tb = max(128, (target_tile_bytes // (4 * A)) // 128 * 128)
    cap = max(128, (B // min_grid) // 128 * 128)
    return min(tb, cap)


def body_forward(signal_from_brain, key, T, *, target_tile_bytes=2 << 20):
    """JAX/Pallas equivalent of Body(T).forward(signal_from_brain).

    signal_from_brain: (B, A) float32 logits
    key:               jax PRNG key for the multinomial draw
    T:                 scalar temperature-like multiplier
    returns:           (B, 1) int32 sampled action indices
    """
    B, A = signal_from_brain.shape

    # Layout plumbing: batch on the lane (minor) axis.
    x_t = jnp.transpose(signal_from_brain)                           # (A, B)
    uniforms = jax.random.uniform(key, (1, B), dtype=jnp.float32)    # one U[0,1) per row

    TB = _pick_tb(B, A, target_tile_bytes=target_tile_bytes)
    grid = (pl.cdiv(B, TB),)
    # NOTE: if B % TB != 0, padded lanes of the last block compute on garbage but are
    # discarded by the masked edge-block writeback — benign.

    kernel = functools.partial(_body_kernel, T=float(T), A=A, matmul_cdf=(A <= 256))
    out = pl.pallas_call(
        kernel,
        out_shape=jax.ShapeDtypeStruct((1, B), jnp.int32),
        grid=grid,
        in_specs=[
            pl.BlockSpec((A, TB), lambda i: (0, i)),   # logits tile, pipelined over batch
            pl.BlockSpec((1, TB), lambda i: (0, i)),   # lane-dense per-row uniforms
        ],
        out_specs=pl.BlockSpec((1, TB), lambda i: (0, i)),   # lane-dense actions
        compiler_params=pltpu.CompilerParams(
            dimension_semantics=("parallel",),          # megacore-shard the batch axis
            vmem_limit_bytes=32 << 20,                  # headroom (v5e default is 16 MiB)
        ),
    )(x_t, uniforms)

    return out.reshape(B, 1)                            # match torch .multinomial() shape


if __name__ == "__main__":
    T = 2.0                       # temperature-like scale from Body(T)
    B, A = 256, 16                # batch rows, number of actions (exercises grid=2)

    key = jax.random.PRNGKey(0)
    k_x, k_u = jax.random.split(key)
    x = jax.random.normal(k_x, (B, A), dtype=jnp.float32)

    actions = jax.block_until_ready(body_forward(x, k_u, T))

    # Shape / dtype / range sanity.
    assert actions.shape == (B, 1)
    assert actions.dtype == jnp.int32
    assert bool(jnp.all((actions >= 0) & (actions < A)))

    # Reference: same inverse-CDF draw, same uniforms, plain JAX.
    u = jax.random.uniform(k_u, (1, B), dtype=jnp.float32).reshape(B, 1)
    logits = x * T
    e = jnp.exp(logits - logits.max(axis=1, keepdims=True))
    denom = e.sum(axis=1, keepdims=True)
    cdf = jnp.cumsum(e, axis=1)
    ref = jnp.minimum((cdf < u * denom).astype(jnp.int32).sum(axis=1, keepdims=True), A - 1)
    # fp rounding-order differences can flip a CDF boundary on rare rows.
    assert int(jnp.sum(actions != ref)) <= 2

    print("KERNEL_OK")
</pallas_src>

<mosaic_0001>
module attributes {stable_mosaic.version = 11 : i64} {
  func.func @_body_kernel(%arg0: i32, %arg1: memref<16x128xf32, #tpu.memory_space<vmem>>, %arg2: memref<1x128xf32, #tpu.memory_space<vmem>>, %arg3: memref<1x128xi32, #tpu.memory_space<vmem>>) attributes {dimension_semantics = [#tpu.dimension_semantics<parallel>], iteration_bounds = array<i64: 2>, scalar_prefetch = 0 : i64, scratch_operands = 0 : i64, tpu.core_type = #tpu.core_type<tc>, window_params = [{transform_indices = @transform_0, window_bounds = array<i64: 16, 128>}, {transform_indices = @transform_1, window_bounds = array<i64: 1, 128>}, {transform_indices = @transform_2, window_bounds = array<i64: 1, 128>}]} {
    %c0 = arith.constant 0 : index
    %c0_0 = arith.constant 0 : index
    %0 = vector.load %arg1[%c0, %c0_0] : memref<16x128xf32, #tpu.memory_space<vmem>>, vector<16x128xf32>
    %cst = arith.constant 2.000000e+00 : f32
    %1 = vector.broadcast %cst : f32 to vector<16x128xf32>
    %2 = arith.mulf %0, %1 : vector<16x128xf32>
    %cst_1 = arith.constant dense<0xFF800000> : vector<128xf32>
    %3 = vector.multi_reduction <maximumf>, %2, %cst_1 [0] : vector<16x128xf32> to vector<128xf32>
    %4 = vector.shape_cast %3 : vector<128xf32> to vector<1x128xf32>
    %5 = vector.broadcast %4 : vector<1x128xf32> to vector<16x128xf32>
    %6 = arith.subf %2, %5 : vector<16x128xf32>
    %7 = math.exp %6 : vector<16x128xf32>
    %cst_2 = arith.constant dense<0.000000e+00> : vector<128xf32>
    %8 = vector.multi_reduction <add>, %7, %cst_2 [0] : vector<16x128xf32> to vector<128xf32>
    %9 = vector.shape_cast %8 : vector<128xf32> to vector<1x128xf32>
    %10 = tpu.iota {dimensions = array<i32: 0>} : vector<16x16xi32>
    %11 = tpu.iota {dimensions = array<i32: 1>} : vector<16x16xi32>
    %12 = arith.cmpi sle, %11, %10 : vector<16x16xi32>
    %13 = arith.extui %12 : vector<16x16xi1> to vector<16x16xi32>
    %14 = arith.sitofp %13 : vector<16x16xi32> to vector<16x16xf32>
    %cst_3 = arith.constant dense<0.000000e+00> : vector<16x128xf32>
    %15 = tpu.matmul %14, %7, %cst_3 {dimension_numbers = #tpu.dot_dimension_numbers<[1], [0], [0], [1], [0, 0, 1, 1], [], []>} : vector<16x16xf32>, vector<16x128xf32>, vector<16x128xf32> -> vector<16x128xf32>
    %c0_4 = arith.constant 0 : index
    %c0_5 = arith.constant 0 : index
    %16 = vector.load %arg2[%c0_4, %c0_5] : memref<1x128xf32, #tpu.memory_space<vmem>>, vector<1x128xf32>
    %17 = arith.mulf %16, %9 : vector<1x128xf32>
    %18 = vector.broadcast %17 : vector<1x128xf32> to vector<16x128xf32>
    %19 = arith.cmpf olt, %15, %18 : vector<16x128xf32>
    %20 = arith.extui %19 : vector<16x128xi1> to vector<16x128xi32>
    %cst_6 = arith.constant dense<0> : vector<128xi32>
    %21 = vector.multi_reduction <add>, %20, %cst_6 [0] : vector<16x128xi32> to vector<128xi32>
    %22 = vector.shape_cast %21 : vector<128xi32> to vector<1x128xi32>
    %c15_i32 = arith.constant 15 : i32
    %23 = vector.broadcast %c15_i32 : i32 to vector<1x128xi32>
    %24 = arith.minsi %22, %23 : vector<1x128xi32>
    %c0_7 = arith.constant 0 : index
    %c0_8 = arith.constant 0 : index
    %25 = vector.load %arg3[%c0_7, %c0_8] : memref<1x128xi32, #tpu.memory_space<vmem>>, vector<1x128xi32>
    tpu.vector_store %arg3[%c0_7, %c0_8], %24 {strides = array<i32>} : memref<1x128xi32, #tpu.memory_space<vmem>>, vector<1x128xi32>,
    return
  }
  func.func @transform_0(%arg0: i32) -> (i32, i32) {
    %c0_i32 = arith.constant 0 : i32
    %c0_i32_0 = arith.constant 0 : i32
    return %c0_i32, %arg0 : i32, i32
  }
  func.func @transform_1(%arg0: i32) -> (i32, i32) {
    %c0_i32 = arith.constant 0 : i32
    %c0_i32_0 = arith.constant 0 : i32
    return %c0_i32, %arg0 : i32, i32
  }
  func.func @transform_2(%arg0: i32) -> (i32, i32) {
    %c0_i32 = arith.constant 0 : i32
    %c0_i32_0 = arith.constant 0 : i32
    return %c0_i32, %arg0 : i32, i32
  }
}

</mosaic_0001>

<llo_original>
// kernel: tpu_custom_call.1
$region0: #{tpu_custom_call.1}
  #allocation0 [shape = 'u32[]', space=smem, size = 0x4, offset = 0x4, fixed_abs, tag = 'smem constant byte address 0x4 - core index']
  #allocation1 [shape = 'u32[144,128]{1,0:T(1,128)}', space=vmem, size = 0x12000, scoped, tag = 'internal scratch']
  %s0 = inlined_call_operand.hbm [shape: f32[16,256], index: 0, kind: input, shape index: {}]
  %s1 = inlined_call_operand.vmem [shape: f32[1,256], index: 1, kind: input, shape index: {}]
  %s2 = inlined_call_operand.hbm [shape: s32[1,256], index: 2, kind: output, shape index: {}]
  %s3 = sld [smem:[#allocation0]]
  $region45: #{tpu_custom_call.1} parent=0
    _
  %s5 = ssub.s32 1, %s3
  %s6 = scalar_select 0, %s5, %s3
  $region1: #{tpu_custom_call.1} parent=0
    #allocation2 [shape = 'u8[16384]{0}', space=vmem, size = 0x4000, scoped, tag = 'input window, operand 0']
    #allocation3 [shape = 's32[2]{0}', space=sflag, size = 0x8, scoped, tag = 'scoped memory for tpu_custom_call.1']
    #allocation4 [shape = 's32[2]{0}', space=sflag, size = 0x8, scoped, tag = 'scoped memory for tpu_custom_call.1']
    #allocation5 [shape = 'u8[1024]{0}', space=vmem, size = 0x400, scoped, tag = 'output window, operand 0']
    %7 = vsyncpa [#allocation3], 0
    %s8 = scalar_lea.sflag [#allocation3], 1
    %9 = vsyncpa %s8, 0
    %10 = vsyncpa [#allocation4], 0
    %s11 = scalar_lea.sflag [#allocation4], 1
    %12 = vsyncpa %s11, 0
    loop: start=0, step=1, limit=4
    $region2: #{tpu_custom_call.1} parent=1 // loop_pre_header
      _
    $region3: #{tpu_custom_call.1} parent=1 // loop_header
      %s14 = sphi 0, %s18
      %p15 = scmp.ge.s32.totalorder %s14, 4
      %s24 = sphi 0, %s26
      %s27 = sphi 0, %s24
      %s28 = sphi 0, %s27
      %s44 = sphi 0, %s28
      %s50 = sphi 0, %s52
      %s53 = sphi 0, %s50
      %s54 = sphi 0, %s53
      %s70 = sphi 0, %s54
      %s76 = sphi 0, %s78
      %s79 = sphi 0, %s76
      %s80 = sphi 0, %s79
      %s96 = sphi 0, %s80
    $region4: #{tpu_custom_call.1} parent=1 // loop_header_branch
      %17 = sbr.rel (%p15) target = $region8
    $region5: #{tpu_custom_call.1} parent=1 // loop_body
      %s19 = ssub.s32 %s14, 1
      %s20 = ssub.s32 %s14, 2
      %s21 = sadd.s32 %s14, 1
      %s22 = ssub.s32 %s14, %s21
      %p23 = scmp.eq.s32.totalorder %s22, 0
      %s25 = sadd.s32 %s24, 1
      %s26 = scalar_select %p23, %s24, %s25
      %p29 = pneg %p23
      %p30 = scmp.eq.s32.totalorder %s14, 1
      %p31 = por %p29, %p30
      %p32 = scmp.ne.s32.totalorder %s24, %s27
      %p33 = scmp.eq.s32.totalorder %s14, 0
      %p34 = por %p32, %p33
      %p35 = scmp.ne.s32.totalorder %s24, %s27
      %p36 = scmp.eq.s32.totalorder %s19, 1
      %p37 = por %p35, %p36
      %p38 = scmp.ne.s32.totalorder %s27, %s28
      %p39 = scmp.eq.s32.totalorder %s19, 0
      %p40 = por %p38, %p39
      %p41 = scmp.ne.s32.totalorder %s27, %s28
      %p42 = scmp.eq.s32.totalorder %s20, 1
      %p43 = por %p41, %p42
      %p45 = scmp.ne.s32.totalorder %s28, %s44
      %p46 = scmp.eq.s32.totalorder %s20, 0
      %p47 = por %p45, %p46
      %s48 = ssub.s32 %s14, %s21
      %p49 = scmp.eq.s32.totalorder %s48, 0
      %s51 = sadd.s32 %s50, 1
      %s52 = scalar_select %p49, %s50, %s51
      %p55 = pneg %p49
      %p56 = scmp.eq.s32.totalorder %s14, 1
      %p57 = por %p55, %p56
      %p58 = scmp.ne.s32.totalorder %s50, %s53
      %p59 = scmp.eq.s32.totalorder %s14, 0
      %p60 = por %p58, %p59
      %p61 = scmp.ne.s32.totalorder %s50, %s53
      %p62 = scmp.eq.s32.totalorder %s19, 1
      %p63 = por %p61, %p62
      %p64 = scmp.ne.s32.totalorder %s53, %s54
      %p65 = scmp.eq.s32.totalorder %s19, 0
      %p66 = por %p64, %p65
      %p67 = scmp.ne.s32.totalorder %s53, %s54
      %p68 = scmp.eq.s32.totalorder %s20, 1
      %p69 = por %p67, %p68
      %p71 = scmp.ne.s32.totalorder %s54, %s70
      %p72 = scmp.eq.s32.totalorder %s20, 0
      %p73 = por %p71, %p72
      %s74 = ssub.s32 %s14, %s21
      %p75 = scmp.eq.s32.totalorder %s74, 0
      %s77 = sadd.s32 %s76, 1
      %s78 = scalar_select %p75, %s76, %s77
      %p81 = pneg %p75
      %p82 = scmp.eq.s32.totalorder %s14, 1
      %p83 = por %p81, %p82
      %p84 = scmp.ne.s32.totalorder %s76, %s79
      %p85 = scmp.eq.s32.totalorder %s14, 0
      %p86 = por %p84, %p85
      %p87 = scmp.ne.s32.totalorder %s76, %s79
      %p88 = scmp.eq.s32.totalorder %s19, 1
      %p89 = por %p87, %p88
      %p90 = scmp.ne.s32.totalorder %s79, %s80
      %p91 = scmp.eq.s32.totalorder %s19, 0
      %p92 = por %p90, %p91
      %p93 = scmp.ne.s32.totalorder %s79, %s80
      %p94 = scmp.eq.s32.totalorder %s20, 1
      %p95 = por %p93, %p94
      %p97 = scmp.ne.s32.totalorder %s80, %s96
      %p98 = scmp.eq.s32.totalorder %s20, 0
      %p99 = por %p97, %p98
      %p100 = scmp.le.s32.totalorder 1, %s14
      %p101 = scmp.lt.s32.totalorder %s14, 3
      %p102 = pnand %p100, %p101
      %p103 = pneg %p102
      // Predicated region
      $region9: #{tpu_custom_call.1} parent=5 // pred_check
        _
      $region10: #{tpu_custom_call.1} parent=5 // pred_check_branch
        %105 = sbr.rel (%p102) target = $region12
      $region11: #{tpu_custom_call.1} parent=5 // pred_region
        %s106 = ssub.s32 %s14, 1
      $region12: #{tpu_custom_call.1} parent=5 // pred_fallthru
        _
      %p107 = scmp.lt.s32.totalorder %s14, 2
      // Predicated region
      $region13: #{tpu_custom_call.1} parent=5 // pred_check
        %p108 = pneg %p107
      $region14: #{tpu_custom_call.1} parent=5 // pred_check_branch
        %110 = sbr.rel (%p108) target = $region16
      $region15: #{tpu_custom_call.1} parent=5 // pred_region
        // Predicated region
        $region17: #{tpu_custom_call.1} parent=15 // pred_check
          %p111 = pneg %p34
        $region18: #{tpu_custom_call.1} parent=15 // pred_check_branch
          %113 = sbr.rel (%p111) target = $region20
        $region19: #{tpu_custom_call.1} parent=15 // pred_region
          %s114 = sand.u32 %s24, 1
          %s115 = scalar_lea.sflag [#allocation3], %s114
          %s116 = sand.u32 %s24, 1
          %s117 = smul.addr %s116, 16
          %s118 = scalar_lea.vmem [#allocation2], %s117
          %s120 = ssub.s32 256, 256
          %121 = vsyncadd %s115, %s120
          %s122 = smul.addr %s14, 128
          %s123 = scalar_lea.hbm %s0, %s122
          %s124 = sshll.u32 %s118, 4
          %s125 = int_to_ptr.vmem [resolvable:$true] %s124
          %130 = dma.hbm_to_vmem [thread:$0]  %s123, 256, %s125, %s115, 256, 128, 8
        $region20: #{tpu_custom_call.1} parent=15 // pred_fallthru
          _
        // Predicated region
        $region21: #{tpu_custom_call.1} parent=15 // pred_check
          %p131 = pneg %p60
        $region22: #{tpu_custom_call.1} parent=15 // pred_check_branch
          %133 = sbr.rel (%p131) target = $region24
        $region23: #{tpu_custom_call.1} parent=15 // pred_region
          %p134 = scmp.lt.s32.totalorder %s14, 1
          %s135 = scalar_select %p134, %s14, 1
          %s136 = scalar_lea.vmem %s1, %s135
        $region24: #{tpu_custom_call.1} parent=15 // pred_fallthru
          _
      $region16: #{tpu_custom_call.1} parent=5 // pred_fallthru
        _
      %p137 = scmp.le.s32.totalorder 1, %s14
      %p138 = scmp.lt.s32.totalorder %s14, 3
      %p139 = pnand %p137, %p138
      %p140 = pneg %p139
      // Predicated region
      $region25: #{tpu_custom_call.1} parent=5 // pred_check
        _
      $region26: #{tpu_custom_call.1} parent=5 // pred_check_branch
        %142 = sbr.rel (%p139) target = $region28
      $region27: #{tpu_custom_call.1} parent=5 // pred_region
        %s143 = ssub.s32 %s14, 1
        %s144 = sand.u32 %s27, 1
        %s145 = scalar_lea.sflag [#allocation3], %s144
        %s146 = sand.u32 %s27, 1
        %s147 = smul.addr %s146, 16
        %s148 = scalar_lea.vmem [#allocation2], %s147
        // Predicated region
        $region29: #{tpu_custom_call.1} parent=27 // pred_check
          %p149 = pneg %p40
        $region30: #{tpu_custom_call.1} parent=27 // pred_check_branch
          %151 = sbr.rel (%p149) target = $region32
        $region31: #{tpu_custom_call.1} parent=27 // pred_region
          %152 = dma.done %s145, 256
        $region32: #{tpu_custom_call.1} parent=27 // pred_fallthru
          _
        %s153 = sand.u32 %s27, 1
        %s154 = scalar_lea.sflag [#allocation3], %s153
        %s155 = sand.u32 %s27, 1
        %s156 = smul.addr %s155, 16
        %s157 = scalar_lea.vmem [#allocation2], %s156
        %p158 = pneg %p40
        %p159 = pneg %p37
        %p160 = scmp.lt.s32.totalorder %s19, 1
        %s161 = scalar_select %p160, %s19, 1
        %s162 = scalar_lea.vmem %s1, %s161
        %p163 = pneg %p66
        %p164 = pneg %p63
        %p165 = pneg %p92
        %p166 = pneg %p89
        %s167 = sand.u32 %s79, 1
        %s168 = scalar_lea.sflag [#allocation4], %s167
        %s169 = sand.u32 %s79, 1
        %s170 = scalar_lea.vmem [#allocation5], %s169
        %p171 = scmp.lt.s32.totalorder %s19, 1
        %s172 = scalar_select %p171, %s19, 1
        %s173 = scalar_lea.vmem %s1, %s172
        %v174 = vld [vmem:[%s148] sm:$0xff]
        %v175 = vld [vmem:[%s148 + $0x8] sm:$0xff]
        %v176 = vmul.f32 %v174, 2.0
        %v177 = vmul.f32 %v175, 2.0
        %v178 = vmax.f32 %v176, %v177
        %v179 = vrot.slane %v178, 4
        %v180 = vmax.f32 %v178, %v179
        %v181 = vrot.slane %v180, 2
        %v182 = vmax.f32 %v180, %v181
        %v183 = vrot.slane %v182, 1
        %v184 = vmax.f32 %v182, %v183
        %v185 = vsub.f32 %v176, %v184
        %v186 = vsub.f32 %v177, %v184
        %v187 = vmul.f32 %v185, 1.442695
        %v188 = vpow.pop %v187
        %v189 = vmul.f32 %v186, 1.442695
        %v190 = vpow.pop %v189
        %v191 = vadd.f32 %v188, %v190
        %v192 = vrot.slane %v191, 4
        %v193 = vadd.f32 %v191, %v192
        %v194 = vrot.slane %v193, 2
        %v195 = vadd.f32 %v193, %v194
        %v196 = vrot.slane %v195, 1
        %v197 = vadd.f32 %v195, %v196
        %v198 = vlaneseq
        %v199 = vshrl.u32 %v198, 7
        %v200 = vadd.s32 %v199, 8
        %v201 = vlaneseq
        %v202 = vand.u32 %v201, 127
        %vm203 = vcmp.le.s32.totalorder %v202, %v199
        %vm204 = vcmp.le.s32.totalorder %v202, %v200
        %v205 = vsel %vm203, 1, 0
        %v206 = vsel %vm204, 1, 0
        %v207 = vcvt.s32.f32 %v205
        %v208 = vcvt.s32.f32 %v206
        %vm209 = vcmask 130048
        %v211 = vsel %vm209, %v207, 0
        %v214 = vsel %vm209, %v208, 0
        %216 = vmatprep.subr.mxu0 0.0
        %217 = vmatpush1.msra.mxu0 %v188
        %218 = vmatprep.subr.mxu0 0.0
        %219 = vmatpush1.msra.mxu0 %v190
        %220 = vmatprep.subr.mxu0 0.0
        %221 = vmatpush1.msra.mxu0 0.0
        %222 = vmatprep.subr.mxu0 0.0
        %223 = vmatpush1.msra.mxu0 0.0
        %224 = vmatprep.subr.mxu0 0.0
        %225 = vmatpush1.msra.mxu0 0.0
        %226 = vmatprep.subr.mxu0 0.0
        %227 = vmatpush1.msra.mxu0 0.0
        %228 = vmatprep.subr.mxu0 0.0
        %229 = vmatpush1.msra.mxu0 0.0
        %230 = vmatprep.subr.mxu0 0.0
        %231 = vmatpush1.msra.mxu0 0.0
        %232 = vmatprep.subr.mxu0 0.0
        %233 = vmatpush1.msra.mxu0 0.0
        %234 = vmatprep.subr.mxu0 0.0
        %235 = vmatpush1.msra.mxu0 0.0
        %236 = vmatprep.subr.mxu0 0.0
        %237 = vmatpush1.msra.mxu0 0.0
        %238 = vmatprep.subr.mxu0 0.0
        %239 = vmatpush1.msra.mxu0 0.0
        %240 = vmatprep.subr.mxu0 0.0
        %241 = vmatpush1.msra.mxu0 0.0
        %242 = vmatprep.subr.mxu0 0.0
        %243 = vmatpush1.msra.mxu0 0.0
        %244 = vmatprep.subr.mxu0 0.0
        %245 = vmatpush1.msra.mxu0 0.0
        %246 = vmatprep.subr.mxu0 0.0
        %247 = vmatpush1.msra.mxu0 0.0
        %248 = vmatprep.subr.mxu0 0.0
        %249 = vmatpush1.msra.mxu0 0.0
        %250 = vmatprep.subr.mxu0 0.0
        %251 = vmatpush1.msra.mxu0 0.0
        %252 = vmatprep.subr.mxu0 0.0
        %253 = vmatpush1.msra.mxu0 0.0
        %254 = vmatprep.subr.mxu0 0.0
        %255 = vmatpush1.msra.mxu0 0.0
        %256 = vmatprep.subr.mxu0 0.0
        %257 = vmatpush1.msra.mxu0 0.0
        %258 = vmatprep.subr.mxu0 0.0
        %259 = vmatpush1.msra.mxu0 0.0
        %260 = vmatprep.subr.mxu0 0.0
        %261 = vmatpush1.msra.mxu0 0.0
        %262 = vmatprep.subr.mxu0 0.0
        %263 = vmatpush1.msra.mxu0 0.0
        %264 = vmatprep.subr.mxu0 0.0
        %265 = vmatpush1.msra.mxu0 0.0
        %266 = vmatprep.subr.mxu0 0.0
        %267 = vmatpush1.msra.mxu0 0.0
        %268 = vmatprep.subr.mxu0 0.0
        %269 = vmatpush1.msra.mxu0 0.0
        %270 = vmatprep.subr.mxu0 0.0
        %271 = vmatpush1.msra.mxu0 0.0
        %272 = vmatprep.subr.mxu0 0.0
        %273 = vmatpush1.msra.mxu0 0.0
        %274 = vmatprep.subr.mxu0 0.0
        %275 = vmatpush1.msra.mxu0 0.0
        %276 = vmatprep.subr.mxu0 0.0
        %277 = vmatpush1.msra.mxu0 0.0
        %278 = vmatprep.subr.mxu0 0.0
        %279 = vmatpush1.msra.mxu0 0.0
        %280 = vmatprep.mubr.f32.mxu0 0.0
        %281 = vmatmul.mubr.f32.gmra.mrb[0].mxu0 %v211
        %v282 = vpop.f32.mrb[0].mxu0
        %v283 = vadd.f32 0.0, %v282
        %v284 = vpop.f32.mrb[0].mxu0
        %285 = vmatprep.mubr.f32.mxu0 0.0
        %286 = vmatmul.mubr.f32.gmra.mrb[0].mxu0 %v214
        %v287 = vpop.f32.mrb[0].mxu0
        %v288 = vadd.f32 0.0, %v287
        %v289 = vpop.f32.mrb[0].mxu0
        %290 = vdwg.mxu0
        %v291 = vld [vmem:[%s173] sm:$0x1]
        %v292 = vmul.f32 %v291, %v197
        %v294 = vlaneseq
        %v295 = vshrl.u32 %v294, 7
        %v296 = vsub.s32 0, %v295
        %v297 = vrot.slane %v292, %v296
        %vm299 = vcmp.lt.f32.partialorder %v283, %v297
        %vm300 = vcmp.lt.f32.partialorder %v288, %v297
        %v301 = vsel %vm299, 1, 0
        %v302 = vsel %vm300, 1, 0
        %v303 = vadd.s32 %v301, %v302
        %v304 = vrot.slane %v303, 4
        %v305 = vadd.s32 %v303, %v304
        %v306 = vrot.slane %v305, 2
        %v307 = vadd.s32 %v305, %v306
        %v308 = vrot.slane %v307, 1
        %v309 = vadd.s32 %v307, %v308
        %vm310 = vcmp.lt.s32.totalorder %v309, 15
        %v311 = vsel %vm310, %v309, 15
        %312 = vst [vmem:[%s170] sm:$0x1] %v311
        %s313 = sand.u32 %s79, 1
        %s314 = scalar_lea.sflag [#allocation4], %s313
        %s315 = sand.u32 %s79, 1
        %s316 = scalar_lea.vmem [#allocation5], %s315
        // Predicated region
        $region33: #{tpu_custom_call.1} parent=27 // pred_check
          %p317 = pneg %p89
        $region34: #{tpu_custom_call.1} parent=27 // pred_check_branch
          %319 = sbr.rel (%p317) target = $region36
        $region35: #{tpu_custom_call.1} parent=27 // pred_region
          %s321 = ssub.s32 16, 16
          %322 = vsyncadd %s314, %s321
          %s323 = smul.addr %s19, 16
          %s324 = scalar_lea.hbm %s2, %s323
          %s326 = sshll.u32 %s316, 4
          %s327 = int_to_ptr.vmem [resolvable:$true] %s326
          %329 = dma.vmem_to_hbm [thread:$0]  %s327, 16, %s324, %s314
        $region36: #{tpu_custom_call.1} parent=27 // pred_fallthru
          _
      $region28: #{tpu_custom_call.1} parent=5 // pred_fallthru
        _
      %p330 = scmp.le.s32.totalorder 2, %s14
      // Predicated region
      $region37: #{tpu_custom_call.1} parent=5 // pred_check
        %p331 = pneg %p330
      $region38: #{tpu_custom_call.1} parent=5 // pred_check_branch
        %333 = sbr.rel (%p331) target = $region40
      $region39: #{tpu_custom_call.1} parent=5 // pred_region
        %s334 = ssub.s32 %s14, 2
        // Predicated region
        $region41: #{tpu_custom_call.1} parent=39 // pred_check
          %p335 = pneg %p95
        $region42: #{tpu_custom_call.1} parent=39 // pred_check_branch
          %337 = sbr.rel (%p335) target = $region44
        $region43: #{tpu_custom_call.1} parent=39 // pred_region
          %s338 = sand.u32 %s80, 1
          %s339 = scalar_lea.sflag [#allocation4], %s338
          %s340 = sand.u32 %s80, 1
          %s341 = scalar_lea.vmem [#allocation5], %s340
          %342 = dma.done %s339, 16
        $region44: #{tpu_custom_call.1} parent=39 // pred_fallthru
          _
      $region40: #{tpu_custom_call.1} parent=5 // pred_fallthru
        _
    $region6: #{tpu_custom_call.1} parent=1 // loop_footer
      %s18 = sadd.s32 1, %s14
    $region7: #{tpu_custom_call.1} parent=1 // loop_footer_branch
      %13 = sbr.rel target = $region3
    $region8: #{tpu_custom_call.1} parent=1 // loop_exit
      _
    %343 = vsyncpa [#allocation3], 1
    %s344 = scalar_lea.sflag [#allocation3], 1
    %345 = vsyncpa %s344, 1
    %346 = vsyncpa [#allocation4], 1
    %s347 = scalar_lea.sflag [#allocation4], 1
    %348 = vsyncpa %s347, 1

</llo_original>
